<compile_context>
chip_gen: v6e
topology: v6e:2x2x1
jax: 0.10.0
libtpu: 0.0.40
codegen_flags: <defaults>
</compile_context>

<pallas_src>
import functools

import jax
import jax.numpy as jnp
from jax.experimental import pallas as pl
from jax.experimental.pallas import tpu as pltpu


def _round_up(x: int, m: int) -> int:
    return ((x + m - 1) // m) * m


def _row_multiple(dtype) -> int:
    # Sublane packing: 8 rows for 4-byte, 16 for 2-byte, 32 for 1-byte dtypes.
    isz = jnp.dtype(dtype).itemsize
    if isz == 1:
        return 32
    if isz == 2:
        return 16
    return 8


def _vmem_capacity_bytes() -> int:
    try:
        return int(pltpu.get_tpu_info().vmem_capacity_bytes)
    except Exception:
        return 64 << 20  # conservative fallback (v7x per-TensorCore)


def _pick_h_chunk(H: int) -> int:
    """Chunk size for streaming the hidden dim.  Full H for small models;
    a 128-multiple divisor for large H so w1t/w2t are streamed, not resident."""
    if H < 2048:
        return H
    for cand in (1024, 512, 256, 128):
        if H % cand == 0:
            return cand
    return H


# ---------------------------------------------------------------------------
# Kernels
# ---------------------------------------------------------------------------
def _gate_mlp_kernel(x_ref, w1t_ref, b1_ref, w2t_ref, b2_ref, o_ref, acc_ref):
    # grid = (m_tiles, h_chunks); h_chunks is the (last, "arbitrary") reduction
    # axis.  acc_ref is a per-M-tile f32 accumulator in VMEM.
    k = pl.program_id(1)

    @pl.when(k == 0)
    def _():
        acc_ref[...] = jnp.zeros_like(acc_ref)

    x = x_ref[...]                                               # [tm, H]
    h = jnp.dot(x, w1t_ref[...], preferred_element_type=jnp.float32)  # [tm, Hc]
    h = jnp.maximum(h + b1_ref[...].astype(jnp.float32), 0.0)
    acc_ref[...] += jnp.dot(h.astype(x.dtype), w2t_ref[...],
                            preferred_element_type=jnp.float32)  # [tm, E_pad]

    @pl.when(k == pl.num_programs(1) - 1)
    def _():
        o_ref[...] = (acc_ref[...]
                      + b2_ref[...].astype(jnp.float32)).astype(o_ref.dtype)


def _gate_fc2_kernel(x_ref, w2t_ref, b2_ref, o_ref):
    # num_hidden_layers == 1 path: fc1 is Identity, no ReLU.
    g = jnp.dot(x_ref[...], w2t_ref[...], preferred_element_type=jnp.float32)
    o_ref[...] = (g + b2_ref[...].astype(jnp.float32)).astype(o_ref.dtype)


# ---------------------------------------------------------------------------
# Param preparation (hoisted out of the forward path: do this once)
# ---------------------------------------------------------------------------
def prepare_gate_params(raw, num_hidden_layers: int = 2, param_dtype=None):
    """Transpose PyTorch-layout Linear weights to [in, out] and lane-pad the
    expert dimension to a multiple of 128.  Optionally cast weights to
    `param_dtype` (e.g. jnp.bfloat16 for the bf16-native MXU on v6e/v7x);
    biases stay in their original dtype and accumulation is f32 regardless."""
    if num_hidden_layers == 0:
        return {"weight": raw["weight"]}

    def cast(w):
        return w.astype(param_dtype) if param_dtype is not None else w

    E = raw["fc2_w"].shape[0]
    E_pad = max(128, _round_up(E, 128))
    w2t = cast(raw["fc2_w"].T)                            # [H, E]
    b2 = raw["fc2_b"].reshape(1, E)
    params = {
        "w2t": jnp.pad(w2t, ((0, 0), (0, E_pad - E))),    # [H, E_pad]
        "b2": jnp.pad(b2, ((0, 0), (0, E_pad - E))),      # [1, E_pad]
        "num_experts": E,                                 # static Python int
    }
    if num_hidden_layers == 2:
        params["w1t"] = cast(raw["fc1_w"].T)              # [H, H]
        params["b1"] = raw["fc1_b"].reshape(1, -1)        # [1, H]
    return params


# ---------------------------------------------------------------------------
# Forward
# ---------------------------------------------------------------------------
def dict_moe_gate_forward(hidden_states, params, num_hidden_layers: int = 2,
                          *, block_m: int | None = None, use_pallas=None):
    """JAX/Pallas equivalent of DictMoEGate.forward.

    hidden_states: [..., hidden].  params: output of prepare_gate_params.
    """
    if num_hidden_layers == 0:
        return params["weight"]

    x = hidden_states
    orig_shape = x.shape
    H = orig_shape[-1]
    x2d = x.reshape(-1, H)
    M = x2d.shape[0]

    E = params["num_experts"]
    w2t = params["w2t"]                     # [H, E_pad]
    b2 = params["b2"]                       # [1, E_pad]
    E_pad = w2t.shape[1]

    if use_pallas is None:
        # Tiny M pays ~0.35us/grid-step overhead; tiny H underfills the MXU.
        use_pallas = (M >= 256) and (H >= 256)

    if not use_pallas:
        h = x2d
        if num_hidden_layers == 2:
            h = jnp.maximum(
                jnp.dot(x2d, params["w1t"], preferred_element_type=jnp.float32)
                + params["b1"], 0.0).astype(x.dtype)
        g = (jnp.dot(h, w2t[:, :E], preferred_element_type=jnp.float32)
             + b2[:, :E]).astype(x.dtype)
        return g.reshape(*orig_shape[:-1], E)

    # ---- Pallas path ----
    vmem_cap = _vmem_capacity_bytes()
    if block_m is None:
        block_m = 256 if vmem_cap <= (64 << 20) else 512

    sub = _row_multiple(x2d.dtype)
    tm = min(block_m, _round_up(M, sub))
    # Ensure >= 2 M-tiles when possible so the "parallel" axis can shard
    # across the two v7x TensorCores (no effect on single-TC v5e/v6e).
    if tm > sub and _round_up(M, tm) // tm < 2:
        tm = max(sub, _round_up(pl.cdiv(M, 2), sub))
    M_pad = _round_up(M, tm)
    if M_pad != M:
        x2d = jnp.pad(x2d, ((0, M_pad - M), (0, 0)))
    m_tiles = M_pad // tm

    itemsize = x2d.dtype.itemsize
    w_item = w2t.dtype.itemsize

    # Cost estimate (full reduction regardless of chunking).
    if num_hidden_layers == 2:
        flops = 2 * M_pad * H * (H + E_pad)
    else:
        flops = 2 * M_pad * H * E_pad
    bytes_accessed = (x2d.size * itemsize
                      + w2t.size * w_item
                      + b2.size * b2.dtype.itemsize
                      + M_pad * E_pad * itemsize)
    if num_hidden_layers == 2:
        bytes_accessed += (params["w1t"].size * params["w1t"].dtype.itemsize
                           + params["b1"].size * params["b1"].dtype.itemsize)
    cost = pl.CostEstimate(flops=int(flops), transcendentals=0,
                           bytes_accessed=int(bytes_accessed))

    def resident_spec(shape):
        # Constant index_map -> one VMEM buffer is enough (no re-DMA).
        return pl.BlockSpec(shape, lambda *idx: tuple(0 for _ in shape),
                            pipeline_mode=pl.Buffered(1))

    if num_hidden_layers == 2:
        Hc = _pick_h_chunk(H)
        k_steps = H // Hc if H % Hc == 0 else 1
        if k_steps == 1:
            Hc = H
        single = k_steps == 1  # constant index maps -> single buffer

        # VMEM budget (accounts for actual buffer counts).
        n_wbuf = 1 if single else 2
        est = 2 * tm * H * itemsize                       # x tiles (dbl-buffered)
        est += 2 * tm * E_pad * itemsize                  # out tiles
        est += tm * E_pad * 4                             # f32 accumulator
        est += E_pad * b2.dtype.itemsize                  # b2 (single buffer)
        est += n_wbuf * (H * Hc * params["w1t"].dtype.itemsize
                         + Hc * params["b1"].dtype.itemsize)
        est += n_wbuf * Hc * E_pad * w_item               # w2t chunks
        est += tm * Hc * 4                                # relu intermediate
        vmem_limit = int(min(int(vmem_cap * 0.9),
                             max(32 << 20, est + (2 << 20))))

        def chunk_spec(shape, index_map):
            if single:
                return pl.BlockSpec(shape, index_map,
                                    pipeline_mode=pl.Buffered(1))
            return pl.BlockSpec(shape, index_map)

        out_pad = pl.pallas_call(
            _gate_mlp_kernel,
            out_shape=jax.ShapeDtypeStruct((M_pad, E_pad), x.dtype),
            grid=(m_tiles, k_steps),
            in_specs=[
                pl.BlockSpec((tm, H), lambda i, k: (i, 0)),        # x tile
                chunk_spec((H, Hc), lambda i, k: (0, k)),          # w1t chunk
                chunk_spec((1, Hc), lambda i, k: (0, k)),          # b1 chunk
                chunk_spec((Hc, E_pad), lambda i, k: (k, 0)),      # w2t chunk
                resident_spec((1, E_pad)),                         # b2
            ],
            out_specs=pl.BlockSpec((tm, E_pad), lambda i, k: (i, 0)),
            scratch_shapes=[pltpu.VMEM((tm, E_pad), jnp.float32)],
            compiler_params=pltpu.CompilerParams(
                dimension_semantics=("parallel", "arbitrary"),
                vmem_limit_bytes=vmem_limit),
            cost_estimate=cost,
        )(x2d, params["w1t"], params["b1"], w2t, b2)
    else:  # num_hidden_layers == 1
        est = (2 * tm * H * itemsize + 2 * tm * E_pad * itemsize
               + H * E_pad * w_item + E_pad * b2.dtype.itemsize
               + tm * E_pad * 4)
        vmem_limit = int(min(int(vmem_cap * 0.9),
                             max(32 << 20, est + (2 << 20))))
        out_pad = pl.pallas_call(
            _gate_fc2_kernel,
            out_shape=jax.ShapeDtypeStruct((M_pad, E_pad), x.dtype),
            grid=(m_tiles,),
            in_specs=[
                pl.BlockSpec((tm, H), lambda i: (i, 0)),           # x tile
                resident_spec((H, E_pad)),                         # w2t
                resident_spec((1, E_pad)),                         # b2
            ],
            out_specs=pl.BlockSpec((tm, E_pad), lambda i: (i, 0)),
            compiler_params=pltpu.CompilerParams(
                dimension_semantics=("parallel",),
                vmem_limit_bytes=vmem_limit),
            cost_estimate=cost,
        )(x2d, w2t, b2)

    out = out_pad[:M, :E]
    return out.reshape(*orig_shape[:-1], E)


# ---------------------------------------------------------------------------
# Synthetic init matching the PyTorch __init__ (PyTorch [out, in] layout)
# ---------------------------------------------------------------------------
def init_dict_moe_gate_params(key, hidden_size, num_experts, init_lambda,
                              num_hidden_layers=2, dtype=jnp.float32):
    raw = {}
    if num_hidden_layers == 2:
        k1, key = jax.random.split(key)
        raw["fc1_w"] = (0.01 * jax.random.normal(
            k1, (hidden_size, hidden_size))).astype(dtype)       # [out, in]
        raw["fc1_b"] = jnp.zeros((hidden_size,), dtype)
    if num_hidden_layers >= 1:
        k2, key = jax.random.split(key)
        raw["fc2_w"] = (0.01 * jax.random.normal(
            k2, (num_experts, hidden_size))).astype(dtype)       # [E, H]
        raw["fc2_b"] = jnp.full((num_experts,), init_lambda, dtype)
    if num_hidden_layers == 0:
        raw["weight"] = jnp.full((num_experts,), init_lambda, dtype)
    return raw


if __name__ == "__main__":
    batch, seq, hidden, num_experts = 2, 8, 32, 4
    init_lambda = 0.3

    key = jax.random.PRNGKey(0)
    k_x, k_p = jax.random.split(key)

    hidden_states = jax.random.normal(k_x, (batch, seq, hidden), jnp.float32)
    x2d = hidden_states.reshape(-1, hidden)

    # --- num_hidden_layers == 2 (fused ReLU-MLP gate) ---
    raw = init_dict_moe_gate_params(k_p, hidden, num_experts, init_lambda,
                                    num_hidden_layers=2)
    params = prepare_gate_params(raw, num_hidden_layers=2)
    # Demo shapes are tiny; force the Pallas path (the auto heuristic would
    # route M<256 / H<256 problems to plain XLA fusion).
    gate = dict_moe_gate_forward(hidden_states, params, num_hidden_layers=2,
                                 use_pallas=True)
    gate = jax.block_until_ready(gate)

    h_ref = jnp.maximum(x2d @ raw["fc1_w"].T + raw["fc1_b"], 0.0)
    g_ref = (h_ref @ raw["fc2_w"].T + raw["fc2_b"]).reshape(
        batch, seq, num_experts)
    assert gate.shape == (batch, seq, num_experts)
    assert jnp.allclose(gate, g_ref, atol=1e-5, rtol=1e-5)

    # --- num_hidden_layers == 1 (fc1 = Identity, no ReLU) ---
    raw1 = init_dict_moe_gate_params(k_p, hidden, num_experts, init_lambda,
                                     num_hidden_layers=1)
    params1 = prepare_gate_params(raw1, num_hidden_layers=1)
    gate1 = jax.block_until_ready(
        dict_moe_gate_forward(hidden_states, params1, num_hidden_layers=1,
                              use_pallas=True))
    g1_ref = (x2d @ raw1["fc2_w"].T + raw1["fc2_b"]).reshape(
        batch, seq, num_experts)
    assert jnp.allclose(gate1, g1_ref, atol=1e-5, rtol=1e-5)

    # --- num_hidden_layers == 0 (bare parameter) ---
    raw0 = init_dict_moe_gate_params(k_p, hidden, num_experts, init_lambda,
                                     num_hidden_layers=0)
    params0 = prepare_gate_params(raw0, num_hidden_layers=0)
    w0 = dict_moe_gate_forward(hidden_states, params0, num_hidden_layers=0)
    assert jnp.allclose(w0, jnp.full((num_experts,), init_lambda))

    print("KERNEL_OK")
</pallas_src>

<mosaic_0001>
module attributes {stable_mosaic.version = 11 : i64} {
  func.func @_gate_mlp_kernel(%arg0: i32, %arg1: i32, %arg2: memref<8x32xf32, #tpu.memory_space<vmem>>, %arg3: memref<32x32xf32, #tpu.memory_space<vmem>>, %arg4: memref<1x32xf32, #tpu.memory_space<vmem>>, %arg5: memref<32x128xf32, #tpu.memory_space<vmem>>, %arg6: memref<1x128xf32, #tpu.memory_space<vmem>>, %arg7: memref<8x128xf32, #tpu.memory_space<vmem>>, %arg8: memref<8x128xf32, #tpu.memory_space<vmem>>) attributes {dimension_semantics = [#tpu.dimension_semantics<parallel>, #tpu.dimension_semantics<arbitrary>], iteration_bounds = array<i64: 2, 1>, scalar_prefetch = 0 : i64, scratch_operands = 1 : i64, tpu.core_type = #tpu.core_type<tc>, window_params = [{transform_indices = @transform_0, window_bounds = array<i64: 8, 32>}, {pipeline_mode = #tpu.pipeline_mode<synchronous>, transform_indices = @transform_1, window_bounds = array<i64: 32, 32>}, {pipeline_mode = #tpu.pipeline_mode<synchronous>, transform_indices = @transform_2, window_bounds = array<i64: 1, 32>}, {pipeline_mode = #tpu.pipeline_mode<synchronous>, transform_indices = @transform_3, window_bounds = array<i64: 32, 128>}, {pipeline_mode = #tpu.pipeline_mode<synchronous>, transform_indices = @transform_4, window_bounds = array<i64: 1, 128>}, {transform_indices = @transform_5, window_bounds = array<i64: 8, 128>}]} {
    %c0_i32 = arith.constant 0 : i32
    %0 = arith.cmpi eq, %arg1, %c0_i32 : i32
    %1 = arith.extui %0 : i1 to i32
    %c0_i32_0 = arith.constant 0 : i32
    %2 = arith.cmpi ne, %1, %c0_i32_0 : i32
    scf.if %2 {
      %cst_16 = arith.constant 0.000000e+00 : f32
      %19 = vector.broadcast %cst_16 : f32 to vector<8x128xf32>
      %c0_17 = arith.constant 0 : index
      %c0_18 = arith.constant 0 : index
      %20 = vector.load %arg8[%c0_17, %c0_18] : memref<8x128xf32, #tpu.memory_space<vmem>>, vector<8x128xf32>
      tpu.vector_store %arg8[%c0_17, %c0_18], %19 {strides = array<i32>} : memref<8x128xf32, #tpu.memory_space<vmem>>, vector<8x128xf32>,
    } else {
    }
    %c0 = arith.constant 0 : index
    %c0_1 = arith.constant 0 : index
    %3 = vector.load %arg2[%c0, %c0_1] : memref<8x32xf32, #tpu.memory_space<vmem>>, vector<8x32xf32>
    %c0_2 = arith.constant 0 : index
    %c0_3 = arith.constant 0 : index
    %4 = vector.load %arg3[%c0_2, %c0_3] : memref<32x32xf32, #tpu.memory_space<vmem>>, vector<32x32xf32>
    %cst = arith.constant dense<0.000000e+00> : vector<8x32xf32>
    %5 = tpu.matmul %3, %4, %cst {dimension_numbers = #tpu.dot_dimension_numbers<[1], [0], [0], [1], [0, 0, 1, 1], [], []>} : vector<8x32xf32>, vector<32x32xf32>, vector<8x32xf32> -> vector<8x32xf32>
    %c0_4 = arith.constant 0 : index
    %c0_5 = arith.constant 0 : index
    %6 = vector.load %arg4[%c0_4, %c0_5] : memref<1x32xf32, #tpu.memory_space<vmem>>, vector<1x32xf32>
    %7 = vector.broadcast %6 : vector<1x32xf32> to vector<8x32xf32>
    %8 = arith.addf %5, %7 : vector<8x32xf32>
    %cst_6 = arith.constant 0.000000e+00 : f32
    %9 = vector.broadcast %cst_6 : f32 to vector<8x32xf32>
    %10 = arith.maximumf %8, %9 : vector<8x32xf32>
    %c0_7 = arith.constant 0 : index
    %c0_8 = arith.constant 0 : index
    %11 = vector.load %arg8[%c0_7, %c0_8] : memref<8x128xf32, #tpu.memory_space<vmem>>, vector<8x128xf32>
    %c0_9 = arith.constant 0 : index
    %c0_10 = arith.constant 0 : index
    %12 = vector.load %arg5[%c0_9, %c0_10] : memref<32x128xf32, #tpu.memory_space<vmem>>, vector<32x128xf32>
    %cst_11 = arith.constant dense<0.000000e+00> : vector<8x128xf32>
    %13 = tpu.matmul %10, %12, %cst_11 {dimension_numbers = #tpu.dot_dimension_numbers<[1], [0], [0], [1], [0, 0, 1, 1], [], []>} : vector<8x32xf32>, vector<32x128xf32>, vector<8x128xf32> -> vector<8x128xf32>
    %14 = arith.addf %11, %13 : vector<8x128xf32>
    %c0_12 = arith.constant 0 : index
    %c0_13 = arith.constant 0 : index
    %15 = vector.load %arg8[%c0_12, %c0_13] : memref<8x128xf32, #tpu.memory_space<vmem>>, vector<8x128xf32>
    tpu.vector_store %arg8[%c0_12, %c0_13], %14 {strides = array<i32>} : memref<8x128xf32, #tpu.memory_space<vmem>>, vector<8x128xf32>,
    %c0_i32_14 = arith.constant 0 : i32
    %16 = arith.cmpi eq, %arg1, %c0_i32_14 : i32
    %17 = arith.extui %16 : i1 to i32
    %c0_i32_15 = arith.constant 0 : i32
    %18 = arith.cmpi ne, %17, %c0_i32_15 : i32
    scf.if %18 {
      %c0_16 = arith.constant 0 : index
      %c0_17 = arith.constant 0 : index
      %19 = vector.load %arg8[%c0_16, %c0_17] : memref<8x128xf32, #tpu.memory_space<vmem>>, vector<8x128xf32>
      %c0_18 = arith.constant 0 : index
      %c0_19 = arith.constant 0 : index
      %20 = vector.load %arg6[%c0_18, %c0_19] : memref<1x128xf32, #tpu.memory_space<vmem>>, vector<1x128xf32>
      %21 = vector.broadcast %20 : vector<1x128xf32> to vector<8x128xf32>
      %22 = arith.addf %19, %21 : vector<8x128xf32>
      %c0_20 = arith.constant 0 : index
      %c0_21 = arith.constant 0 : index
      %23 = vector.load %arg7[%c0_20, %c0_21] : memref<8x128xf32, #tpu.memory_space<vmem>>, vector<8x128xf32>
      tpu.vector_store %arg7[%c0_20, %c0_21], %22 {strides = array<i32>} : memref<8x128xf32, #tpu.memory_space<vmem>>, vector<8x128xf32>,
    } else {
    }
    return
  }
  func.func @transform_0(%arg0: i32, %arg1: i32) -> (i32, i32) {
    %c0_i32 = arith.constant 0 : i32
    %c0_i32_0 = arith.constant 0 : i32
    return %arg0, %c0_i32 : i32, i32
  }
  func.func @transform_1(%arg0: i32, %arg1: i32) -> (i32, i32) {
    %c0_i32 = arith.constant 0 : i32
    %c0_i32_0 = arith.constant 0 : i32
    return %c0_i32, %arg1 : i32, i32
  }
  func.func @transform_2(%arg0: i32, %arg1: i32) -> (i32, i32) {
    %c0_i32 = arith.constant 0 : i32
    %c0_i32_0 = arith.constant 0 : i32
    return %c0_i32, %arg1 : i32, i32
  }
  func.func @transform_3(%arg0: i32, %arg1: i32) -> (i32, i32) {
    %c0_i32 = arith.constant 0 : i32
    %c0_i32_0 = arith.constant 0 : i32
    return %arg1, %c0_i32 : i32, i32
  }
  func.func @transform_4(%arg0: i32, %arg1: i32) -> (i32, i32) {
    %c0_i32 = arith.constant 0 : i32
    %c0_i32_0 = arith.constant 0 : i32
    %c0_i32_1 = arith.constant 0 : i32
    return %c0_i32, %c0_i32_0 : i32, i32
  }
  func.func @transform_5(%arg0: i32, %arg1: i32) -> (i32, i32) {
    %c0_i32 = arith.constant 0 : i32
    %c0_i32_0 = arith.constant 0 : i32
    return %arg0, %c0_i32 : i32, i32
  }
}

</mosaic_0001>

<llo_original>
// kernel: tpu_custom_call.1
$region0: #{tpu_custom_call.1}
  #allocation0 [shape = 'u32[]', space=smem, size = 0x4, offset = 0x4, fixed_abs, tag = 'smem constant byte address 0x4 - core index']
  #allocation1 [shape = 'u32[144,128]{1,0:T(1,128)}', space=vmem, size = 0x12000, scoped, tag = 'internal scratch']
  #allocation2 [shape = 'f32[8,128]{1,0:T(8,128)}', space=vmem, size = 0x1000, scoped, tag = 'scratch operand']
  %s0 = inlined_call_operand.hbm [shape: f32[16,32], index: 0, kind: input, shape index: {}]
  %s1 = inlined_call_operand.hbm [shape: f32[32,32], index: 1, kind: input, shape index: {}]
  %s2 = inlined_call_operand.vmem [shape: f32[1,32], index: 2, kind: input, shape index: {}]
  %s3 = inlined_call_operand.hbm [shape: f32[32,128], index: 3, kind: input, shape index: {}]
  %s4 = inlined_call_operand.vmem [shape: f32[1,128], index: 4, kind: input, shape index: {}]
  %s5 = inlined_call_operand.hbm [shape: f32[16,128], index: 5, kind: output, shape index: {}]
  %s6 = sld [smem:[#allocation0]]
  $region73: #{tpu_custom_call.1} parent=0
    _
  %s8 = ssub.s32 1, %s6
  %s9 = scalar_select 0, %s8, %s6
  $region1: #{tpu_custom_call.1} parent=0
    #allocation3 [shape = 'u8[8192]{0}', space=vmem, size = 0x2000, scoped, tag = 'input window, operand 0']
    #allocation4 [shape = 's32[2]{0}', space=sflag, size = 0x8, scoped, tag = 'scoped memory for tpu_custom_call.1']
    #allocation5 [shape = 's32[2]{0}', space=sflag, size = 0x8, scoped, tag = 'scoped memory for tpu_custom_call.1']
    #allocation6 [shape = 'u8[16384]{0}', space=vmem, size = 0x4000, scoped, tag = 'input window, operand 1, single buffered']
    #allocation7 [shape = 's32[1]{0}', space=sflag, size = 0x4, scoped, tag = 'scoped memory for tpu_custom_call.1']
    #allocation8 [shape = 'u8[16384]{0}', space=vmem, size = 0x4000, scoped, tag = 'input window, operand 3, single buffered']
    #allocation9 [shape = 'u8[8192]{0}', space=vmem, size = 0x2000, scoped, tag = 'output window, operand 0']
    %10 = vsyncpa [#allocation4], 0
    %s11 = scalar_lea.sflag [#allocation4], 1
    %12 = vsyncpa %s11, 0
    %13 = vsyncpa [#allocation7], 0
    %14 = vsyncpa [#allocation5], 0
    %s15 = scalar_lea.sflag [#allocation5], 1
    %16 = vsyncpa %s15, 0
    loop: start=0, step=1, limit=4
    $region2: #{tpu_custom_call.1} parent=1 // loop_pre_header
      _
    $region3: #{tpu_custom_call.1} parent=1 // loop_header
      %s18 = sphi 0, %s22
      %p19 = scmp.ge.s32.totalorder %s18, 4
      %s25 = sphi 0, %s37
      %s26 = sphi 0, %s33
      %s27 = sphi 0, %s25
      %s28 = sphi 0, %s26
      %s29 = sphi 0, %s27
      %s30 = sphi 0, %s28
      %s40 = sphi 0, %s42
      %s43 = sphi 0, %s40
      %s44 = sphi 0, %s43
      %s60 = sphi 0, %s44
      %s66 = sphi 0, %s68
      %s69 = sphi 0, %s66
      %s70 = sphi 0, %s69
      %s86 = sphi 0, %s70
      %s92 = sphi 0, %s94
      %s95 = sphi 0, %s92
      %s96 = sphi 0, %s95
      %s112 = sphi 0, %s96
      %s118 = sphi 0, %s120
      %s121 = sphi 0, %s118
      %s122 = sphi 0, %s121
      %s138 = sphi 0, %s122
      %s142 = sphi 0, %s142
      %s144 = sphi 0, %s142
      %s145 = sphi 0, %s144
      %s159 = sphi 0, %s145
      %s165 = sphi 0, %s167
      %s168 = sphi 0, %s165
      %s169 = sphi 0, %s168
      %s185 = sphi 0, %s169
    $region4: #{tpu_custom_call.1} parent=1 // loop_header_branch
      %21 = sbr.rel (%p19) target = $region8
    $region5: #{tpu_custom_call.1} parent=1 // loop_body
      %s23 = ssub.s32 %s18, 1
      %s24 = ssub.s32 %s18, 2
      %s31 = sadd.s32 1, %s26
      %p32 = scmp.ge.s32.totalorder %s31, 1
      %s33 = scalar_select %p32, 0, %s31
      %s34 = sadd.s32 1, %s25
      %s35 = scalar_select %p32, %s34, %s25
      %p36 = scmp.ge.s32.totalorder %s35, 2
      %s37 = scalar_select %p36, 0, %s35
      %s38 = ssub.s32 %s25, %s37
      %p39 = scmp.eq.s32.totalorder %s38, 0
      %s41 = sadd.s32 %s40, 1
      %s42 = scalar_select %p39, %s40, %s41
      %p45 = pneg %p39
      %p46 = scmp.eq.s32.totalorder %s18, 1
      %p47 = por %p45, %p46
      %p48 = scmp.ne.s32.totalorder %s40, %s43
      %p49 = scmp.eq.s32.totalorder %s18, 0
      %p50 = por %p48, %p49
      %p51 = scmp.ne.s32.totalorder %s40, %s43
      %p52 = scmp.eq.s32.totalorder %s23, 1
      %p53 = por %p51, %p52
      %p54 = scmp.ne.s32.totalorder %s43, %s44
      %p55 = scmp.eq.s32.totalorder %s23, 0
      %p56 = por %p54, %p55
      %p57 = scmp.ne.s32.totalorder %s43, %s44
      %p58 = scmp.eq.s32.totalorder %s24, 1
      %p59 = por %p57, %p58
      %p61 = scmp.ne.s32.totalorder %s44, %s60
      %p62 = scmp.eq.s32.totalorder %s24, 0
      %p63 = por %p61, %p62
      %s64 = ssub.s32 %s26, %s33
      %p65 = scmp.eq.s32.totalorder %s64, 0
      %s67 = sadd.s32 %s66, 1
      %s68 = scalar_select %p65, %s66, %s67
      %p71 = pneg %p65
      %p72 = scmp.eq.s32.totalorder %s18, 1
      %p73 = por %p71, %p72
      %p74 = scmp.ne.s32.totalorder %s66, %s69
      %p75 = scmp.eq.s32.totalorder %s18, 0
      %p76 = por %p74, %p75
      %p77 = scmp.ne.s32.totalorder %s66, %s69
      %p78 = scmp.eq.s32.totalorder %s23, 1
      %p79 = por %p77, %p78
      %p80 = scmp.ne.s32.totalorder %s69, %s70
      %p81 = scmp.eq.s32.totalorder %s23, 0
      %p82 = por %p80, %p81
      %p83 = scmp.ne.s32.totalorder %s69, %s70
      %p84 = scmp.eq.s32.totalorder %s24, 1
      %p85 = por %p83, %p84
      %p87 = scmp.ne.s32.totalorder %s70, %s86
      %p88 = scmp.eq.s32.totalorder %s24, 0
      %p89 = por %p87, %p88
      %s90 = ssub.s32 %s26, %s33
      %p91 = scmp.eq.s32.totalorder %s90, 0
      %s93 = sadd.s32 %s92, 1
      %s94 = scalar_select %p91, %s92, %s93
      %p97 = pneg %p91
      %p98 = scmp.eq.s32.totalorder %s18, 1
      %p99 = por %p97, %p98
      %p100 = scmp.ne.s32.totalorder %s92, %s95
      %p101 = scmp.eq.s32.totalorder %s18, 0
      %p102 = por %p100, %p101
      %p103 = scmp.ne.s32.totalorder %s92, %s95
      %p104 = scmp.eq.s32.totalorder %s23, 1
      %p105 = por %p103, %p104
      %p106 = scmp.ne.s32.totalorder %s95, %s96
      %p107 = scmp.eq.s32.totalorder %s23, 0
      %p108 = por %p106, %p107
      %p109 = scmp.ne.s32.totalorder %s95, %s96
      %p110 = scmp.eq.s32.totalorder %s24, 1
      %p111 = por %p109, %p110
      %p113 = scmp.ne.s32.totalorder %s96, %s112
      %p114 = scmp.eq.s32.totalorder %s24, 0
      %p115 = por %p113, %p114
      %s116 = ssub.s32 %s26, %s33
      %p117 = scmp.eq.s32.totalorder %s116, 0
      %s119 = sadd.s32 %s118, 1
      %s120 = scalar_select %p117, %s118, %s119
      %p123 = pneg %p117
      %p124 = scmp.eq.s32.totalorder %s18, 1
      %p125 = por %p123, %p124
      %p126 = scmp.ne.s32.totalorder %s118, %s121
      %p127 = scmp.eq.s32.totalorder %s18, 0
      %p128 = por %p126, %p127
      %p129 = scmp.ne.s32.totalorder %s118, %s121
      %p130 = scmp.eq.s32.totalorder %s23, 1
      %p131 = por %p129, %p130
      %p132 = scmp.ne.s32.totalorder %s121, %s122
      %p133 = scmp.eq.s32.totalorder %s23, 0
      %p134 = por %p132, %p133
      %p135 = scmp.ne.s32.totalorder %s121, %s122
      %p136 = scmp.eq.s32.totalorder %s24, 1
      %p137 = por %p135, %p136
      %p139 = scmp.ne.s32.totalorder %s122, %s138
      %p140 = scmp.eq.s32.totalorder %s24, 0
      %p141 = por %p139, %p140
      %s143 = sadd.s32 %s142, 1
      %p146 = scmp.eq.s32.totalorder %s18, 1
      %p147 = scmp.ne.s32.totalorder %s142, %s144
      %p148 = scmp.eq.s32.totalorder %s18, 0
      %p149 = por %p147, %p148
      %p150 = scmp.ne.s32.totalorder %s142, %s144
      %p151 = scmp.eq.s32.totalorder %s23, 1
      %p152 = por %p150, %p151
      %p153 = scmp.ne.s32.totalorder %s144, %s145
      %p154 = scmp.eq.s32.totalorder %s23, 0
      %p155 = por %p153, %p154
      %p156 = scmp.ne.s32.totalorder %s144, %s145
      %p157 = scmp.eq.s32.totalorder %s24, 1
      %p158 = por %p156, %p157
      %p160 = scmp.ne.s32.totalorder %s145, %s159
      %p161 = scmp.eq.s32.totalorder %s24, 0
      %p162 = por %p160, %p161
      %s163 = ssub.s32 %s25, %s37
      %p164 = scmp.eq.s32.totalorder %s163, 0
      %s166 = sadd.s32 %s165, 1
      %s167 = scalar_select %p164, %s165, %s166
      %p170 = pneg %p164
      %p171 = scmp.eq.s32.totalorder %s18, 1
      %p172 = por %p170, %p171
      %p173 = scmp.ne.s32.totalorder %s165, %s168
      %p174 = scmp.eq.s32.totalorder %s18, 0
      %p175 = por %p173, %p174
      %p176 = scmp.ne.s32.totalorder %s165, %s168
      %p177 = scmp.eq.s32.totalorder %s23, 1
      %p178 = por %p176, %p177
      %p179 = scmp.ne.s32.totalorder %s168, %s169
      %p180 = scmp.eq.s32.totalorder %s23, 0
      %p181 = por %p179, %p180
      %p182 = scmp.ne.s32.totalorder %s168, %s169
      %p183 = scmp.eq.s32.totalorder %s24, 1
      %p184 = por %p182, %p183
      %p186 = scmp.ne.s32.totalorder %s169, %s185
      %p187 = scmp.eq.s32.totalorder %s24, 0
      %p188 = por %p186, %p187
      %p189 = scmp.le.s32.totalorder 1, %s18
      %p190 = scmp.lt.s32.totalorder %s18, 3
      %p191 = pnand %p189, %p190
      %p192 = pneg %p191
      // Predicated region
      $region9: #{tpu_custom_call.1} parent=5 // pred_check
        _
      $region10: #{tpu_custom_call.1} parent=5 // pred_check_branch
        %194 = sbr.rel (%p191) target = $region12
      $region11: #{tpu_custom_call.1} parent=5 // pred_region
        %s195 = ssub.s32 %s18, 1
        // Predicated region
        $region13: #{tpu_custom_call.1} parent=11 // pred_check
          %p196 = pneg %p82
        $region14: #{tpu_custom_call.1} parent=11 // pred_check_branch
          %198 = sbr.rel (%p196) target = $region16
        $region15: #{tpu_custom_call.1} parent=11 // pred_region
          %s200 = ssub.s32 512, 512
          %201 = vsyncadd [#allocation7], %s200
          %s202 = smul.addr %s28, 128
          %s203 = scalar_lea.hbm %s1, %s202
          %s204 = sshll.u32 [#allocation6], 4
          %s205 = int_to_ptr.vmem [resolvable:$true] %s204
          %210 = dma.hbm_to_vmem [thread:$0]  %s203, 512, %s205, [#allocation7], 128, 128, 8
        $region16: #{tpu_custom_call.1} parent=11 // pred_fallthru
          _
        // Predicated region
        $region17: #{tpu_custom_call.1} parent=11 // pred_check
          %p211 = pneg %p108
        $region18: #{tpu_custom_call.1} parent=11 // pred_check_branch
          %213 = sbr.rel (%p211) target = $region20
        $region19: #{tpu_custom_call.1} parent=11 // pred_region
          %p214 = scmp.lt.s32.totalorder %s28, 0
          %s215 = scalar_select %p214, %s28, 0
          %s216 = scalar_lea.vmem %s2, %s215
        $region20: #{tpu_custom_call.1} parent=11 // pred_fallthru
          _
        // Predicated region
        $region21: #{tpu_custom_call.1} parent=11 // pred_check
          %p217 = pneg %p134
        $region22: #{tpu_custom_call.1} parent=11 // pred_check_branch
          %219 = sbr.rel (%p217) target = $region24
        $region23: #{tpu_custom_call.1} parent=11 // pred_region
          %s220 = smul.u32 4, %s28
          %s222 = ssub.s32 512, 512
          %223 = vsyncadd [#allocation7], %s222
          %s224 = smul.addr %s220, 128
          %s225 = scalar_lea.hbm %s3, %s224
          %s226 = sshll.u32 [#allocation8], 4
          %s227 = int_to_ptr.vmem [resolvable:$true] %s226
          %232 = dma.hbm_to_vmem [thread:$0]  %s225, 512, %s227, [#allocation7], 128, 128, 8
        $region24: #{tpu_custom_call.1} parent=11 // pred_fallthru
          _
        // Predicated region
        $region25: #{tpu_custom_call.1} parent=11 // pred_check
          %p233 = pneg %p155
        $region26: #{tpu_custom_call.1} parent=11 // pred_check_branch
          %235 = sbr.rel (%p233) target = $region28
        $region27: #{tpu_custom_call.1} parent=11 // pred_region
          _
        $region28: #{tpu_custom_call.1} parent=11 // pred_fallthru
          _
      $region12: #{tpu_custom_call.1} parent=5 // pred_fallthru
        _
      %p236 = scmp.lt.s32.totalorder %s18, 2
      // Predicated region
      $region29: #{tpu_custom_call.1} parent=5 // pred_check
        %p237 = pneg %p236
      $region30: #{tpu_custom_call.1} parent=5 // pred_check_branch
        %239 = sbr.rel (%p237) target = $region32
      $region31: #{tpu_custom_call.1} parent=5 // pred_region
        // Predicated region
        $region33: #{tpu_custom_call.1} parent=31 // pred_check
          %p240 = pneg %p50
        $region34: #{tpu_custom_call.1} parent=31 // pred_check_branch
          %242 = sbr.rel (%p240) target = $region36
        $region35: #{tpu_custom_call.1} parent=31 // pred_region
          %s243 = sand.u32 %s40, 1
          %s244 = scalar_lea.sflag [#allocation4], %s243
          %s245 = sand.u32 %s40, 1
          %s246 = smul.addr %s245, 8
          %s247 = scalar_lea.vmem [#allocation3], %s246
          %s249 = ssub.s32 128, 128
          %250 = vsyncadd %s244, %s249
          %s251 = smul.addr %s25, 128
          %s252 = scalar_lea.hbm %s0, %s251
          %s254 = sshll.u32 %s247, 4
          %s255 = int_to_ptr.vmem [resolvable:$true] %s254
          %257 = dma.hbm_to_vmem [thread:$0]  %s252, 128, %s255, %s244
        $region36: #{tpu_custom_call.1} parent=31 // pred_fallthru
          _
      $region32: #{tpu_custom_call.1} parent=5 // pred_fallthru
        _
      %p258 = scmp.le.s32.totalorder 1, %s18
      %p259 = scmp.lt.s32.totalorder %s18, 3
      %p260 = pnand %p258, %p259
      %p261 = pneg %p260
      // Predicated region
      $region37: #{tpu_custom_call.1} parent=5 // pred_check
        _
      $region38: #{tpu_custom_call.1} parent=5 // pred_check_branch
        %263 = sbr.rel (%p260) target = $region40
      $region39: #{tpu_custom_call.1} parent=5 // pred_region
        %s264 = ssub.s32 %s18, 1
        %s265 = sand.u32 %s43, 1
        %s266 = scalar_lea.sflag [#allocation4], %s265
        %s267 = sand.u32 %s43, 1
        %s268 = smul.addr %s267, 8
        %s269 = scalar_lea.vmem [#allocation3], %s268
        // Predicated region
        $region41: #{tpu_custom_call.1} parent=39 // pred_check
          %p270 = pneg %p56
        $region42: #{tpu_custom_call.1} parent=39 // pred_check_branch
          %272 = sbr.rel (%p270) target = $region44
        $region43: #{tpu_custom_call.1} parent=39 // pred_region
          %273 = dma.done %s266, 128
        $region44: #{tpu_custom_call.1} parent=39 // pred_fallthru
          _
        // Predicated region
        $region45: #{tpu_custom_call.1} parent=39 // pred_check
          %p274 = pneg %p82
        $region46: #{tpu_custom_call.1} parent=39 // pred_check_branch
          %276 = sbr.rel (%p274) target = $region48
        $region47: #{tpu_custom_call.1} parent=39 // pred_region
          %277 = dma.done [#allocation7], 512
        $region48: #{tpu_custom_call.1} parent=39 // pred_fallthru
          _
        // Predicated region
        $region49: #{tpu_custom_call.1} parent=39 // pred_check
          %p278 = pneg %p134
        $region50: #{tpu_custom_call.1} parent=39 // pred_check_branch
          %280 = sbr.rel (%p278) target = $region52
        $region51: #{tpu_custom_call.1} parent=39 // pred_region
          %281 = dma.done [#allocation7], 512
        $region52: #{tpu_custom_call.1} parent=39 // pred_fallthru
          _
        %s282 = sand.u32 %s43, 1
        %s283 = scalar_lea.sflag [#allocation4], %s282
        %s284 = sand.u32 %s43, 1
        %s285 = smul.addr %s284, 8
        %s286 = scalar_lea.vmem [#allocation3], %s285
        %p287 = pneg %p56
        %p288 = pneg %p53
        %p289 = pneg %p82
        %p290 = pneg %p79
        %p291 = scmp.lt.s32.totalorder %s28, 0
        %s292 = scalar_select %p291, %s28, 0
        %s293 = scalar_lea.vmem %s2, %s292
        %p294 = pneg %p108
        %p295 = pneg %p105
        %p296 = pneg %p134
        %p297 = pneg %p131
        %p298 = pneg %p155
        %p299 = pneg %p152
        %p300 = pneg %p181
        %p301 = pneg %p178
        %s302 = sand.u32 %s168, 1
        %s303 = scalar_lea.sflag [#allocation5], %s302
        %s304 = sand.u32 %s168, 1
        %s305 = smul.addr %s304, 8
        %s306 = scalar_lea.vmem [#allocation9], %s305
        %p307 = scmp.lt.s32.totalorder %s28, 0
        %s308 = scalar_select %p307, %s28, 0
        %s309 = scalar_lea.vmem %s2, %s308
        %s310 = smul.u32 4, %s28
        %p311 = scmp.eq.s32.totalorder %s28, 0
        // Predicated region
        $region53: #{tpu_custom_call.1} parent=39 // pred_check
          %p312 = pneg %p311
        $region54: #{tpu_custom_call.1} parent=39 // pred_check_branch
          %314 = sbr.rel (%p312) target = $region56
        $region55: #{tpu_custom_call.1} parent=39 // pred_region
          %315 = vst [vmem:[#allocation2] sm:$0xff] 0.0
        $region56: #{tpu_custom_call.1} parent=39 // pred_fallthru
          _
        %v316 = vld [vmem:[%s269] sm:$0xff]
        %v317 = vld [vmem:[#allocation6] sm:$0xff]
        %v318 = vld [vmem:[#allocation6 + $0x8] sm:$0xff]
        %v319 = vld [vmem:[#allocation6 + $0x10] sm:$0xff]
        %v320 = vld [vmem:[#allocation6 + $0x18] sm:$0xff]
        %v321 = vld [vmem:[%s309] sm:$0x1]
        %v323 = vlaneseq
        %v324 = vshrl.u32 %v323, 7
        %v325 = vsub.s32 0, %v324
        %v326 = vrot.slane %v321, %v325
        %vm328 = vcmask 261120
        %v330 = vsel %vm328, %v316, 0
        %332 = vmatprep.subr.mxu0 0.0
        %333 = vmatpush1.msra.mxu0 0.0
        %334 = vmatprep.subr.mxu0 0.0
        %335 = vmatpush1.msra.mxu0 0.0
        %336 = vmatprep.subr.mxu0 0.0
        %337 = vmatpush1.msra.mxu0 0.0
        %338 = vmatprep.subr.mxu0 0.0
        %339 = vmatpush1.msra.mxu0 0.0
        %340 = vmatprep.subr.mxu0 0.0
        %341 = vmatpush1.msra.mxu0 0.0
        %342 = vmatprep.subr.mxu0 0.0
        %343 = vmatpush1.msra.mxu0 0.0
        %344 = vmatprep.subr.mxu0 0.0
        %345 = vmatpush1.msra.mxu0 0.0
        %346 = vmatprep.subr.mxu0 0.0
        %347 = vmatpush1.msra.mxu0 0.0
        %348 = vmatprep.subr.mxu0 0.0
        %349 = vmatpush1.msra.mxu0 0.0
        %350 = vmatprep.subr.mxu0 0.0
        %351 = vmatpush1.msra.mxu0 0.0
        %352 = vmatprep.subr.mxu0 0.0
        %353 = vmatpush1.msra.mxu0 0.0
        %354 = vmatprep.subr.mxu0 0.0
        %355 = vmatpush1.msra.mxu0 0.0
        %356 = vmatprep.subr.mxu0 0.0
        %357 = vmatpush1.msra.mxu0 %v320
        %358 = vmatprep.subr.mxu0 0.0
        %359 = vmatpush1.msra.mxu0 %v319
        %360 = vmatprep.subr.mxu0 0.0
        %361 = vmatpush1.msra.mxu0 %v318
        %362 = vmatprep.subr.mxu0 0.0
        %363 = vmatpush1.msra.mxu0 %v317
        %364 = vmatprep.subr.mxu0 0.0
        %365 = vmatpush2.msra.mxu0 0.0
        %366 = vmatprep.subr.mxu0 0.0
        %367 = vmatpush2.msra.mxu0 0.0
        %368 = vmatprep.subr.mxu0 0.0
        %369 = vmatpush2.msra.mxu0 0.0
        %370 = vmatprep.subr.mxu0 0.0
        %371 = vmatpush2.msra.mxu0 0.0
        %372 = vmatprep.subr.mxu0 0.0
        %373 = vmatpush2.msra.mxu0 0.0
        %374 = vmatprep.subr.mxu0 0.0
        %375 = vmatpush2.msra.mxu0 0.0
        %376 = vmatprep.subr.mxu0 0.0
        %377 = vmatpush2.msra.mxu0 0.0
        %378 = vmatprep.subr.mxu0 0.0
        %379 = vmatpush2.msra.mxu0 0.0
        %380 = vmatprep.subr.mxu0 0.0
        %381 = vmatpush2.msra.mxu0 0.0
        %382 = vmatprep.subr.mxu0 0.0
        %383 = vmatpush2.msra.mxu0 0.0
        %384 = vmatprep.subr.mxu0 0.0
        %385 = vmatpush2.msra.mxu0 0.0
        %386 = vmatprep.subr.mxu0 0.0
        %387 = vmatpush2.msra.mxu0 0.0
        %388 = vmatprep.subr.mxu0 0.0
        %389 = vmatpush2.msra.mxu0 0.0
        %390 = vmatprep.subr.mxu0 0.0
        %391 = vmatpush2.msra.mxu0 0.0
        %392 = vmatprep.subr.mxu0 0.0
        %393 = vmatpush2.msra.mxu0 0.0
        %394 = vmatprep.subr.mxu0 0.0
        %395 = vmatpush2.msra.mxu0 0.0
        %396 = vmatprep.mubr.f32.mxu0 0.0
        %397 = vmatmul.mubr.f32.gmra.mxu0 %v330
        %v398 = vpop.f32.mrf.mxu0
        %v399 = vadd.f32 %v326, %v398
        %v400 = vpop.f32.mrf.mxu0
        %401 = vdwg.mxu0
        %v402 = vmax.f32 %v399, 0.0
        %v403 = vld [vmem:[#allocation2] sm:$0xff]
        %v404 = vld [vmem:[#allocation8] sm:$0xff]
        %v405 = vld [vmem:[#allocation8 + $0x8] sm:$0xff]
        %v406 = vld [vmem:[#allocation8 + $0x10] sm:$0xff]
        %v407 = vld [vmem:[#allocation8 + $0x18] sm:$0xff]
        %v409 = vsel %vm328, %v402, 0
        %411 = vmatprep.subr.mxu0 0.0
        %412 = vmatpush1.msra.mxu0 0.0
        %413 = vmatprep.subr.mxu0 0.0
        %414 = vmatpush1.msra.mxu0 0.0
        %415 = vmatprep.subr.mxu0 0.0
        %416 = vmatpush1.msra.mxu0 0.0
        %417 = vmatprep.subr.mxu0 0.0
        %418 = vmatpush1.msra.mxu0 0.0
        %419 = vmatprep.subr.mxu0 0.0
        %420 = vmatpush1.msra.mxu0 0.0
        %421 = vmatprep.subr.mxu0 0.0
        %422 = vmatpush1.msra.mxu0 0.0
        %423 = vmatprep.subr.mxu0 0.0
        %424 = vmatpush1.msra.mxu0 0.0
        %425 = vmatprep.subr.mxu0 0.0
        %426 = vmatpush1.msra.mxu0 0.0
        %427 = vmatprep.subr.mxu0 0.0
        %428 = vmatpush1.msra.mxu0 0.0
        %429 = vmatprep.subr.mxu0 0.0
        %430 = vmatpush1.msra.mxu0 0.0
        %431 = vmatprep.subr.mxu0 0.0
        %432 = vmatpush1.msra.mxu0 0.0
        %433 = vmatprep.subr.mxu0 0.0
        %434 = vmatpush1.msra.mxu0 0.0
        %435 = vmatprep.subr.mxu0 0.0
        %436 = vmatpush1.msra.mxu0 %v407
        %437 = vmatprep.subr.mxu0 0.0
        %438 = vmatpush1.msra.mxu0 %v406
        %439 = vmatprep.subr.mxu0 0.0
        %440 = vmatpush1.msra.mxu0 %v405
        %441 = vmatprep.subr.mxu0 0.0
        %442 = vmatpush1.msra.mxu0 %v404
        %443 = vmatprep.subr.mxu0 0.0
        %444 = vmatpush2.msra.mxu0 0.0
        %445 = vmatprep.subr.mxu0 0.0
        %446 = vmatpush2.msra.mxu0 0.0
        %447 = vmatprep.subr.mxu0 0.0
        %448 = vmatpush2.msra.mxu0 0.0
        %449 = vmatprep.subr.mxu0 0.0
        %450 = vmatpush2.msra.mxu0 0.0
        %451 = vmatprep.subr.mxu0 0.0
        %452 = vmatpush2.msra.mxu0 0.0
        %453 = vmatprep.subr.mxu0 0.0
        %454 = vmatpush2.msra.mxu0 0.0
        %455 = vmatprep.subr.mxu0 0.0
        %456 = vmatpush2.msra.mxu0 0.0
        %457 = vmatprep.subr.mxu0 0.0
        %458 = vmatpush2.msra.mxu0 0.0
        %459 = vmatprep.subr.mxu0 0.0
        %460 = vmatpush2.msra.mxu0 0.0
        %461 = vmatprep.subr.mxu0 0.0
        %462 = vmatpush2.msra.mxu0 0.0
        %463 = vmatprep.subr.mxu0 0.0
        %464 = vmatpush2.msra.mxu0 0.0
        %465 = vmatprep.subr.mxu0 0.0
        %466 = vmatpush2.msra.mxu0 0.0
        %467 = vmatprep.subr.mxu0 0.0
        %468 = vmatpush2.msra.mxu0 0.0
        %469 = vmatprep.subr.mxu0 0.0
        %470 = vmatpush2.msra.mxu0 0.0
        %471 = vmatprep.subr.mxu0 0.0
        %472 = vmatpush2.msra.mxu0 0.0
        %473 = vmatprep.subr.mxu0 0.0
        %474 = vmatpush2.msra.mxu0 0.0
        %475 = vmatprep.mubr.f32.mxu0 0.0
        %476 = vmatmul.mubr.f32.gmra.mxu0 %v409
        %v477 = vpop.f32.mrf.mxu0
        %v478 = vadd.f32 0.0, %v477
        %v479 = vpop.f32.mrf.mxu0
        %480 = vdwg.mxu0
        %v481 = vadd.f32 %v403, %v478
        %482 = vst [vmem:[#allocation2] sm:$0xff] %v481
        // Predicated region
        $region57: #{tpu_custom_call.1} parent=39 // pred_check
          %p483 = pneg %p311
        $region58: #{tpu_custom_call.1} parent=39 // pred_check_branch
          %485 = sbr.rel (%p483) target = $region60
        $region59: #{tpu_custom_call.1} parent=39 // pred_region
          %v486 = vld [vmem:[#allocation2] sm:$0xff]
          %v487 = vld [vmem:[%s4] sm:$0x1]
          %v489 = vlaneseq
          %v490 = vshrl.u32 %v489, 7
          %v491 = vsub.s32 0, %v490
          %v492 = vrot.slane %v487, %v491
          %v494 = vadd.f32 %v486, %v492
          %495 = vst [vmem:[%s306] sm:$0xff] %v494
        $region60: #{tpu_custom_call.1} parent=39 // pred_fallthru
          _
        %s496 = sand.u32 %s168, 1
        %s497 = scalar_lea.sflag [#allocation5], %s496
        %s498 = sand.u32 %s168, 1
        %s499 = smul.addr %s498, 8
        %s500 = scalar_lea.vmem [#allocation9], %s499
        // Predicated region
        $region61: #{tpu_custom_call.1} parent=39 // pred_check
          %p501 = pneg %p178
        $region62: #{tpu_custom_call.1} parent=39 // pred_check_branch
          %503 = sbr.rel (%p501) target = $region64
        $region63: #{tpu_custom_call.1} parent=39 // pred_region
          %s505 = ssub.s32 128, 128
          %506 = vsyncadd %s497, %s505
          %s507 = smul.addr %s27, 128
          %s508 = scalar_lea.hbm %s5, %s507
          %s510 = sshll.u32 %s500, 4
          %s511 = int_to_ptr.vmem [resolvable:$true] %s510
          %513 = dma.vmem_to_hbm [thread:$0]  %s511, 128, %s508, %s497
        $region64: #{tpu_custom_call.1} parent=39 // pred_fallthru
          _
      $region40: #{tpu_custom_call.1} parent=5 // pred_fallthru
        _
      %p514 = scmp.le.s32.totalorder 2, %s18
      // Predicated region
      $region65: #{tpu_custom_call.1} parent=5 // pred_check
        %p515 = pneg %p514
      $region66: #{tpu_custom_call.1} parent=5 // pred_check_branch
        %517 = sbr.rel (%p515) target = $region68
      $region67: #{tpu_custom_call.1} parent=5 // pred_region
        %s518 = ssub.s32 %s18, 2
        // Predicated region
        $region69: #{tpu_custom_call.1} parent=67 // pred_check
          %p519 = pneg %p184
        $region70: #{tpu_custom_call.1} parent=67 // pred_check_branch
          %521 = sbr.rel (%p519) target = $region72
        $region71: #{tpu_custom_call.1} parent=67 // pred_region
          %s522 = sand.u32 %s169, 1
          %s523 = scalar_lea.sflag [#allocation5], %s522
          %s524 = sand.u32 %s169, 1
          %s525 = smul.addr %s524, 8
          %s526 = scalar_lea.vmem [#allocation9], %s525
          %527 = dma.done %s523, 128
        $region72: #{tpu_custom_call.1} parent=67 // pred_fallthru
          _
      $region68: #{tpu_custom_call.1} parent=5 // pred_fallthru
        _
    $region6: #{tpu_custom_call.1} parent=1 // loop_footer
      %s22 = sadd.s32 1, %s18
    $region7: #{tpu_custom_call.1} parent=1 // loop_footer_branch
      %17 = sbr.rel target = $region3
    $region8: #{tpu_custom_call.1} parent=1 // loop_exit
      _
    %528 = vsyncpa [#allocation4], 1
    %s529 = scalar_lea.sflag [#allocation4], 1
    %530 = vsyncpa %s529, 1
    %531 = vsyncpa [#allocation7], 1
    %532 = vsyncpa [#allocation5], 1
    %s533 = scalar_lea.sflag [#allocation5], 1
    %534 = vsyncpa %s533, 1

</llo_original>
